<compile_context>
chip_gen: v7x
topology: tpu7x:2x2x1
jax: 0.10.0
libtpu: 0.0.40
codegen_flags: <defaults>
</compile_context>

<pallas_src>
import functools

import jax
import jax.numpy as jnp
from jax.experimental import pallas as pl
from jax.experimental.pallas import tpu as pltpu

BN_EPS = 1e-5
VMEM_LIMIT = 48 * 1024 * 1024  # headroom under v7x's 64 MiB physical VMEM


def _round_up(x, m):
    return ((x + m - 1) // m) * m


def _matmul_stats_kernel(x_ref, w_ref, b_ref, y_ref, mean_ref, var_ref,
                         *, n_rows, tm):
    """Pass 1 (grid over N tiles, reduction axis 'arbitrary'):
       y_tile = x_tile @ W + b  (bf16 operands, f32 accumulation on the MXU),
       plus running column sum / sum-of-squares of z = (y - b) for BN stats.
       mean_ref / var_ref have constant index_maps => VMEM-resident
       accumulators across the whole grid (P3 pattern)."""
    i = pl.program_id(0)

    @pl.when(i == 0)
    def _init():
        mean_ref[...] = jnp.zeros_like(mean_ref)
        var_ref[...] = jnp.zeros_like(var_ref)

    b = b_ref[...]                                             # (1, out_p) f32
    y = jnp.dot(x_ref[...], w_ref[...],
                preferred_element_type=jnp.float32) + b        # MXU, f32 acc
    y_ref[...] = y

    # Mask rows past the true batch size (zero padding) so the statistics are
    # exact; subtract the bias as a per-column shift to reduce cancellation in
    # E[z^2] - E[z]^2.
    row = i * tm + jax.lax.broadcasted_iota(jnp.int32, y.shape, 0)
    z = jnp.where(row < n_rows, y - b, 0.0)
    mean_ref[...] += jnp.sum(z, axis=0, keepdims=True)         # running sum(z)
    var_ref[...] += jnp.sum(z * z, axis=0, keepdims=True)      # running sum(z^2)

    @pl.when(i == pl.num_programs(0) - 1)
    def _finalize():
        inv_n = 1.0 / n_rows
        m_z = mean_ref[...] * inv_n
        mean_ref[...] = b + m_z                                # E[y]
        var_ref[...] = var_ref[...] * inv_n - m_z * m_z        # biased variance


def _bn_relu_kernel(y_ref, scale_ref, shift_ref, o_ref):
    """Pass 2 (fully parallel over N tiles): fused normalize+affine+ReLU,
       a single FMA + max per element (memory-bound, lane-dense stores)."""
    o_ref[...] = jnp.maximum(
        y_ref[...] * scale_ref[...] + shift_ref[...], 0.0).astype(o_ref.dtype)


def linear_bn_relu(x, w_io, bias, gamma, beta, *, tm=512):
    """y = ReLU(BatchNorm1d(x @ w_io + bias)) with training-mode batch stats.

    x:     (batch, seq, in_features) float32
    w_io:  (in_features, out_features)  -- Linear weight stored pre-transposed
    bias, gamma, beta: (out_features,)
    Returns (batch, seq, out_features) float32.
    """
    batch, seq, in_f = x.shape
    out_f = w_io.shape[1]
    n = batch * seq

    # Lane-dense, 128-aligned output columns; padding sliced off at the end.
    out_p = _round_up(out_f, 128)
    # N tile: default 512 (multiple of 256 for v6e/v7x MXU, fits v7x 64 MiB
    # VMEM with double-buffering); shrink (8-aligned) for tiny batches.
    tm = min(tm, _round_up(n, 8))
    n_tiles = (n + tm - 1) // tm
    n_pad = n_tiles * tm

    x2d = x.reshape(n, in_f)
    if n_pad != n:
        x2d = jnp.pad(x2d, ((0, n_pad - n), (0, 0)))
    pad_c = out_p - out_f
    if pad_c:
        w_io = jnp.pad(w_io, ((0, 0), (0, pad_c)))
        bias = jnp.pad(bias, (0, pad_c))
        gamma = jnp.pad(gamma, (0, pad_c))
        beta = jnp.pad(beta, (0, pad_c))

    # bf16 operands on the MXU; accumulation stays f32 inside the kernel.
    x_bf = x2d.astype(jnp.bfloat16)
    w_bf = w_io.astype(jnp.bfloat16)
    b2d = bias.reshape(1, out_p).astype(jnp.float32)

    # ---------------- Pass 1: tiled matmul + batch statistics ----------------
    y2d, mean, var = pl.pallas_call(
        functools.partial(_matmul_stats_kernel, n_rows=n, tm=tm),
        out_shape=(
            jax.ShapeDtypeStruct((n_pad, out_p), jnp.float32),   # y (pre-BN)
            jax.ShapeDtypeStruct((1, out_p), jnp.float32),       # mean
            jax.ShapeDtypeStruct((1, out_p), jnp.float32),       # var
        ),
        grid_spec=pltpu.PrefetchScalarGridSpec(
            num_scalar_prefetch=0,
            grid=(n_tiles,),
            in_specs=[
                pl.BlockSpec((tm, in_f), lambda i: (i, 0)),      # x tile (pipelined)
                pl.BlockSpec((in_f, out_p), lambda i: (0, 0)),   # W resident in VMEM
                pl.BlockSpec((1, out_p), lambda i: (0, 0)),      # bias resident
            ],
            out_specs=(
                pl.BlockSpec((tm, out_p), lambda i: (i, 0)),     # y tile
                pl.BlockSpec((1, out_p), lambda i: (0, 0)),      # sum  -> mean
                pl.BlockSpec((1, out_p), lambda i: (0, 0)),      # sumsq-> var
            ),
        ),
        compiler_params=pltpu.CompilerParams(
            dimension_semantics=("arbitrary",),   # stats carried across N tiles
            vmem_limit_bytes=VMEM_LIMIT,
        ),
    )(x_bf, w_bf, b2d)

    # Fold BN into a single per-column scale/shift (tiny (1, out_p) ops).
    inv_std = jax.lax.rsqrt(var + BN_EPS)
    scale = gamma.reshape(1, out_p) * inv_std
    shift = beta.reshape(1, out_p) - mean * scale

    # ---------------- Pass 2: tiled normalize + affine + ReLU ----------------
    out2d = pl.pallas_call(
        _bn_relu_kernel,
        out_shape=jax.ShapeDtypeStruct((n_pad, out_p), jnp.float32),
        grid_spec=pltpu.PrefetchScalarGridSpec(
            num_scalar_prefetch=0,
            grid=(n_tiles,),
            in_specs=[
                pl.BlockSpec((tm, out_p), lambda i: (i, 0)),
                pl.BlockSpec((1, out_p), lambda i: (0, 0)),
                pl.BlockSpec((1, out_p), lambda i: (0, 0)),
            ],
            out_specs=pl.BlockSpec((tm, out_p), lambda i: (i, 0)),
        ),
        compiler_params=pltpu.CompilerParams(
            dimension_semantics=("parallel",),    # independent tiles -> both TCs on v7x
            vmem_limit_bytes=VMEM_LIMIT,
        ),
    )(y2d, scale, shift)

    return out2d[:n, :out_f].reshape(batch, seq, out_f)


def init_params(key, in_features, out_features):
    # kaiming_uniform_(weight, nonlinearity='relu'):
    #   gain = sqrt(2), fan_in = in_features, bound = gain * sqrt(3 / fan_in).
    # The Linear weight is transposed ONCE here and stored as (in, out) so the
    # kernel runs a plain (N, in) @ (in, out) MXU matmul every call.
    bound = (2.0 ** 0.5) * ((3.0 / in_features) ** 0.5)
    weight = jax.random.uniform(
        key, (out_features, in_features), jnp.float32, minval=-bound, maxval=bound)
    w_io = weight.T                                   # (in, out), done once
    bias = jnp.zeros((out_features,), jnp.float32)
    gamma = jnp.ones((out_features,), jnp.float32)    # BatchNorm1d weight
    beta = jnp.zeros((out_features,), jnp.float32)    # BatchNorm1d bias
    return w_io, bias, gamma, beta


if __name__ == "__main__":
    batch, seq, in_features, out_features = 2, 8, 32, 64

    key = jax.random.PRNGKey(0)
    kx, kw = jax.random.split(key)
    x = jax.random.normal(kx, (batch, seq, in_features), jnp.float32)
    w_io, bias, gamma, beta = init_params(kw, in_features, out_features)

    out = jax.block_until_ready(linear_bn_relu(x, w_io, bias, gamma, beta))

    # Pure-JAX reference using the same bf16-operand / f32-accumulate matmul.
    x2d = x.reshape(-1, in_features)
    y = jnp.dot(x2d.astype(jnp.bfloat16), w_io.astype(jnp.bfloat16),
                preferred_element_type=jnp.float32) + bias
    mean = y.mean(axis=0, keepdims=True)
    var = ((y - mean) ** 2).mean(axis=0, keepdims=True)
    ref = jnp.maximum((y - mean) * jax.lax.rsqrt(var + BN_EPS) * gamma + beta, 0.0)
    ref = ref.reshape(batch, seq, out_features)
    assert jnp.allclose(out, ref, atol=1e-3, rtol=1e-3), "mismatch vs reference"

    print("KERNEL_OK")
</pallas_src>

<mosaic_0001>
module attributes {stable_mosaic.version = 11 : i64} {
  func.func @_matmul_stats_kernel(%arg0: i32, %arg1: memref<16x32xbf16, #tpu.memory_space<vmem>>, %arg2: memref<32x128xbf16, #tpu.memory_space<vmem>>, %arg3: memref<1x128xf32, #tpu.memory_space<vmem>>, %arg4: memref<16x128xf32, #tpu.memory_space<vmem>>, %arg5: memref<1x128xf32, #tpu.memory_space<vmem>>, %arg6: memref<1x128xf32, #tpu.memory_space<vmem>>) attributes {dimension_semantics = [#tpu.dimension_semantics<arbitrary>], iteration_bounds = array<i64: 1>, scalar_prefetch = 0 : i64, scratch_operands = 0 : i64, tpu.core_type = #tpu.core_type<tc>, window_params = [{transform_indices = @transform_0, window_bounds = array<i64: 16, 32>}, {pipeline_mode = #tpu.pipeline_mode<synchronous>, transform_indices = @transform_1, window_bounds = array<i64: 32, 128>}, {pipeline_mode = #tpu.pipeline_mode<synchronous>, transform_indices = @transform_2, window_bounds = array<i64: 1, 128>}, {transform_indices = @transform_3, window_bounds = array<i64: 16, 128>}, {pipeline_mode = #tpu.pipeline_mode<synchronous>, transform_indices = @transform_4, window_bounds = array<i64: 1, 128>}, {pipeline_mode = #tpu.pipeline_mode<synchronous>, transform_indices = @transform_5, window_bounds = array<i64: 1, 128>}]} {
    %c0_i32 = arith.constant 0 : i32
    %0 = arith.cmpi eq, %arg0, %c0_i32 : i32
    %1 = arith.extui %0 : i1 to i32
    %c0_i32_0 = arith.constant 0 : i32
    %2 = arith.cmpi ne, %1, %c0_i32_0 : i32
    scf.if %2 {
      %cst_22 = arith.constant 0.000000e+00 : f32
      %34 = vector.broadcast %cst_22 : f32 to vector<1x128xf32>
      %c0_23 = arith.constant 0 : index
      %c0_24 = arith.constant 0 : index
      %35 = vector.load %arg5[%c0_23, %c0_24] : memref<1x128xf32, #tpu.memory_space<vmem>>, vector<1x128xf32>
      tpu.vector_store %arg5[%c0_23, %c0_24], %34 {strides = array<i32>} : memref<1x128xf32, #tpu.memory_space<vmem>>, vector<1x128xf32>,
      %cst_25 = arith.constant 0.000000e+00 : f32
      %36 = vector.broadcast %cst_25 : f32 to vector<1x128xf32>
      %c0_26 = arith.constant 0 : index
      %c0_27 = arith.constant 0 : index
      %37 = vector.load %arg6[%c0_26, %c0_27] : memref<1x128xf32, #tpu.memory_space<vmem>>, vector<1x128xf32>
      tpu.vector_store %arg6[%c0_26, %c0_27], %36 {strides = array<i32>} : memref<1x128xf32, #tpu.memory_space<vmem>>, vector<1x128xf32>,
    } else {
    }
    %c0 = arith.constant 0 : index
    %c0_1 = arith.constant 0 : index
    %3 = vector.load %arg3[%c0, %c0_1] : memref<1x128xf32, #tpu.memory_space<vmem>>, vector<1x128xf32>
    %c0_2 = arith.constant 0 : index
    %c0_3 = arith.constant 0 : index
    %4 = vector.load %arg1[%c0_2, %c0_3] : memref<16x32xbf16, #tpu.memory_space<vmem>>, vector<16x32xbf16>
    %c0_4 = arith.constant 0 : index
    %c0_5 = arith.constant 0 : index
    %5 = vector.load %arg2[%c0_4, %c0_5] : memref<32x128xbf16, #tpu.memory_space<vmem>>, vector<32x128xbf16>
    %cst = arith.constant dense<0.000000e+00> : vector<16x128xf32>
    %6 = tpu.matmul %4, %5, %cst {dimension_numbers = #tpu.dot_dimension_numbers<[1], [0], [0], [1], [0, 0, 1, 1], [], []>} : vector<16x32xbf16>, vector<32x128xbf16>, vector<16x128xf32> -> vector<16x128xf32>
    %7 = vector.broadcast %3 : vector<1x128xf32> to vector<16x128xf32>
    %8 = arith.addf %6, %7 : vector<16x128xf32>
    %c0_6 = arith.constant 0 : index
    %c0_7 = arith.constant 0 : index
    %9 = vector.load %arg4[%c0_6, %c0_7] : memref<16x128xf32, #tpu.memory_space<vmem>>, vector<16x128xf32>
    tpu.vector_store %arg4[%c0_6, %c0_7], %8 {strides = array<i32>} : memref<16x128xf32, #tpu.memory_space<vmem>>, vector<16x128xf32>,
    %c16_i32 = arith.constant 16 : i32
    %10 = arith.muli %arg0, %c16_i32 : i32
    %11 = tpu.iota {dimensions = array<i32: 0>} : vector<16x128xi32>
    %12 = vector.broadcast %10 : i32 to vector<16x128xi32>
    %13 = arith.addi %12, %11 : vector<16x128xi32>
    %c16_i32_8 = arith.constant 16 : i32
    %14 = vector.broadcast %c16_i32_8 : i32 to vector<16x128xi32>
    %15 = arith.cmpi slt, %13, %14 : vector<16x128xi32>
    %16 = vector.broadcast %3 : vector<1x128xf32> to vector<16x128xf32>
    %17 = arith.subf %8, %16 : vector<16x128xf32>
    %cst_9 = arith.constant 0.000000e+00 : f32
    %18 = vector.broadcast %cst_9 : f32 to vector<16x128xf32>
    %19 = arith.select %15, %17, %18 : vector<16x128xi1>, vector<16x128xf32>
    %c0_10 = arith.constant 0 : index
    %c0_11 = arith.constant 0 : index
    %20 = vector.load %arg5[%c0_10, %c0_11] : memref<1x128xf32, #tpu.memory_space<vmem>>, vector<1x128xf32>
    %cst_12 = arith.constant dense<0.000000e+00> : vector<128xf32>
    %21 = vector.multi_reduction <add>, %19, %cst_12 [0] : vector<16x128xf32> to vector<128xf32>
    %22 = vector.shape_cast %21 : vector<128xf32> to vector<1x128xf32>
    %23 = arith.addf %20, %22 : vector<1x128xf32>
    %c0_13 = arith.constant 0 : index
    %c0_14 = arith.constant 0 : index
    %24 = vector.load %arg5[%c0_13, %c0_14] : memref<1x128xf32, #tpu.memory_space<vmem>>, vector<1x128xf32>
    tpu.vector_store %arg5[%c0_13, %c0_14], %23 {strides = array<i32>} : memref<1x128xf32, #tpu.memory_space<vmem>>, vector<1x128xf32>,
    %c0_15 = arith.constant 0 : index
    %c0_16 = arith.constant 0 : index
    %25 = vector.load %arg6[%c0_15, %c0_16] : memref<1x128xf32, #tpu.memory_space<vmem>>, vector<1x128xf32>
    %26 = arith.mulf %19, %19 : vector<16x128xf32>
    %cst_17 = arith.constant dense<0.000000e+00> : vector<128xf32>
    %27 = vector.multi_reduction <add>, %26, %cst_17 [0] : vector<16x128xf32> to vector<128xf32>
    %28 = vector.shape_cast %27 : vector<128xf32> to vector<1x128xf32>
    %29 = arith.addf %25, %28 : vector<1x128xf32>
    %c0_18 = arith.constant 0 : index
    %c0_19 = arith.constant 0 : index
    %30 = vector.load %arg6[%c0_18, %c0_19] : memref<1x128xf32, #tpu.memory_space<vmem>>, vector<1x128xf32>
    tpu.vector_store %arg6[%c0_18, %c0_19], %29 {strides = array<i32>} : memref<1x128xf32, #tpu.memory_space<vmem>>, vector<1x128xf32>,
    %c0_i32_20 = arith.constant 0 : i32
    %31 = arith.cmpi eq, %arg0, %c0_i32_20 : i32
    %32 = arith.extui %31 : i1 to i32
    %c0_i32_21 = arith.constant 0 : i32
    %33 = arith.cmpi ne, %32, %c0_i32_21 : i32
    scf.if %33 {
      %c0_22 = arith.constant 0 : index
      %c0_23 = arith.constant 0 : index
      %34 = vector.load %arg5[%c0_22, %c0_23] : memref<1x128xf32, #tpu.memory_space<vmem>>, vector<1x128xf32>
      %cst_24 = arith.constant 6.250000e-02 : f32
      %35 = vector.broadcast %cst_24 : f32 to vector<1x128xf32>
      %36 = arith.mulf %34, %35 : vector<1x128xf32>
      %37 = arith.addf %3, %36 : vector<1x128xf32>
      %c0_25 = arith.constant 0 : index
      %c0_26 = arith.constant 0 : index
      %38 = vector.load %arg5[%c0_25, %c0_26] : memref<1x128xf32, #tpu.memory_space<vmem>>, vector<1x128xf32>
      tpu.vector_store %arg5[%c0_25, %c0_26], %37 {strides = array<i32>} : memref<1x128xf32, #tpu.memory_space<vmem>>, vector<1x128xf32>,
      %c0_27 = arith.constant 0 : index
      %c0_28 = arith.constant 0 : index
      %39 = vector.load %arg6[%c0_27, %c0_28] : memref<1x128xf32, #tpu.memory_space<vmem>>, vector<1x128xf32>
      %cst_29 = arith.constant 6.250000e-02 : f32
      %40 = vector.broadcast %cst_29 : f32 to vector<1x128xf32>
      %41 = arith.mulf %39, %40 : vector<1x128xf32>
      %42 = arith.mulf %36, %36 : vector<1x128xf32>
      %43 = arith.subf %41, %42 : vector<1x128xf32>
      %c0_30 = arith.constant 0 : index
      %c0_31 = arith.constant 0 : index
      %44 = vector.load %arg6[%c0_30, %c0_31] : memref<1x128xf32, #tpu.memory_space<vmem>>, vector<1x128xf32>
      tpu.vector_store %arg6[%c0_30, %c0_31], %43 {strides = array<i32>} : memref<1x128xf32, #tpu.memory_space<vmem>>, vector<1x128xf32>,
    } else {
    }
    return
  }
  func.func @transform_0(%arg0: i32) -> (i32, i32) {
    %c0_i32 = arith.constant 0 : i32
    %c0_i32_0 = arith.constant 0 : i32
    return %arg0, %c0_i32 : i32, i32
  }
  func.func @transform_1(%arg0: i32) -> (i32, i32) {
    %c0_i32 = arith.constant 0 : i32
    %c0_i32_0 = arith.constant 0 : i32
    %c0_i32_1 = arith.constant 0 : i32
    return %c0_i32, %c0_i32_0 : i32, i32
  }
  func.func @transform_2(%arg0: i32) -> (i32, i32) {
    %c0_i32 = arith.constant 0 : i32
    %c0_i32_0 = arith.constant 0 : i32
    %c0_i32_1 = arith.constant 0 : i32
    return %c0_i32, %c0_i32_0 : i32, i32
  }
  func.func @transform_3(%arg0: i32) -> (i32, i32) {
    %c0_i32 = arith.constant 0 : i32
    %c0_i32_0 = arith.constant 0 : i32
    return %arg0, %c0_i32 : i32, i32
  }
  func.func @transform_4(%arg0: i32) -> (i32, i32) {
    %c0_i32 = arith.constant 0 : i32
    %c0_i32_0 = arith.constant 0 : i32
    %c0_i32_1 = arith.constant 0 : i32
    return %c0_i32, %c0_i32_0 : i32, i32
  }
  func.func @transform_5(%arg0: i32) -> (i32, i32) {
    %c0_i32 = arith.constant 0 : i32
    %c0_i32_0 = arith.constant 0 : i32
    %c0_i32_1 = arith.constant 0 : i32
    return %c0_i32, %c0_i32_0 : i32, i32
  }
}

</mosaic_0001>

<llo_original>
// kernel: tpu_custom_call.1
$region0: #{tpu_custom_call.1}
  #allocation0 [shape = 'u32[]', space=smem, size = 0x4, offset = 0x4, fixed_abs, tag = 'smem constant byte address 0x4 - core index']
  #allocation1 [shape = 'u32[144,128]{1,0:T(1,128)}', space=vmem, size = 0x12000, scoped, tag = 'internal scratch']
  %s0 = inlined_call_operand.hbm [shape: bf16[16,32], index: 0, kind: input, shape index: {}]
  %s1 = inlined_call_operand.hbm [shape: bf16[32,128], index: 1, kind: input, shape index: {}]
  %s2 = inlined_call_operand.vmem [shape: f32[1,128], index: 2, kind: input, shape index: {}]
  %s3 = inlined_call_operand.hbm [shape: f32[16,128], index: 3, kind: output, shape index: {0}]
  %s4 = inlined_call_operand.hbm [shape: f32[1,128], index: 4, kind: output, shape index: {1}]
  %s5 = inlined_call_operand.hbm [shape: f32[1,128], index: 5, kind: output, shape index: {2}]
  %6 = xla_tuple %s3, %s4, %s5
  %s7 = sld [smem:[#allocation0]]
  $region54: #{tpu_custom_call.1} parent=0
    _
  %s9 = ssub.s32 1, %s7
  %s10 = scalar_select 0, %s9, %s7
  $region1: #{tpu_custom_call.1} parent=0
    #allocation2 [shape = 'u8[4096]{0}', space=vmem, size = 0x1000, scoped, tag = 'input window, operand 0, single buffered']
    #allocation3 [shape = 's32[1]{0}', space=sflag, size = 0x4, scoped, tag = 'scoped memory for tpu_custom_call.1']
    #allocation4 [shape = 's32[1]{0}', space=sflag, size = 0x4, scoped, tag = 'scoped memory for tpu_custom_call.1']
    #allocation5 [shape = 'u8[8192]{0}', space=vmem, size = 0x2000, scoped, tag = 'input window, operand 1, single buffered']
    #allocation6 [shape = 's32[1]{0}', space=sflag, size = 0x4, scoped, tag = 'scoped memory for tpu_custom_call.1']
    #allocation7 [shape = 'u8[8192]{0}', space=vmem, size = 0x2000, scoped, tag = 'output window, operand 0, single buffered']
    #allocation8 [shape = 'u8[512]{0}', space=vmem, size = 0x400, scoped, tag = 'output window, operand 1, single buffered']
    #allocation9 [shape = 's32[1]{0}', space=sflag, size = 0x4, scoped, tag = 'scoped memory for tpu_custom_call.1']
    #allocation10 [shape = 'u8[512]{0}', space=vmem, size = 0x400, scoped, tag = 'output window, operand 2, single buffered']
    %11 = vsyncpa [#allocation3], 0
    %12 = vsyncpa [#allocation6], 0
    %13 = vsyncpa [#allocation4], 0
    %14 = vsyncpa [#allocation9], 0
    // Predicated region
    $region2: #{tpu_custom_call.1} parent=1 // pred_check
      _
    $region3: #{tpu_custom_call.1} parent=1 // pred_check_branch
      %16 = sbr.rel (0) target = $region5
    $region4: #{tpu_custom_call.1} parent=1 // pred_region
      %s18 = ssub.s32 128, 128
      %19 = vsyncadd [#allocation3], %s18
      %s20 = sshll.u32 [#allocation2], 4
      %s21 = int_to_ptr.vmem [resolvable:$true] %s20
      %26 = dma.hbm_to_vmem [thread:$0]  %s0, 128, %s21, [#allocation3], 64, 64, 4
    $region5: #{tpu_custom_call.1} parent=1 // pred_fallthru
      _
    // Predicated region
    $region6: #{tpu_custom_call.1} parent=1 // pred_check
      _
    $region7: #{tpu_custom_call.1} parent=1 // pred_check_branch
      %28 = sbr.rel (0) target = $region9
    $region8: #{tpu_custom_call.1} parent=1 // pred_region
      %s30 = ssub.s32 256, 256
      %31 = vsyncadd [#allocation6], %s30
      %s32 = sshll.u32 [#allocation5], 4
      %s33 = int_to_ptr.vmem [resolvable:$true] %s32
      %38 = dma.hbm_to_vmem [thread:$0]  %s1, 256, %s33, [#allocation6], 64, 64, 4
    $region9: #{tpu_custom_call.1} parent=1 // pred_fallthru
      _
    // Predicated region
    $region10: #{tpu_custom_call.1} parent=1 // pred_check
      _
    $region11: #{tpu_custom_call.1} parent=1 // pred_check_branch
      %40 = sbr.rel (0) target = $region13
    $region12: #{tpu_custom_call.1} parent=1 // pred_region
      _
    $region13: #{tpu_custom_call.1} parent=1 // pred_fallthru
      _
    // Predicated region
    $region14: #{tpu_custom_call.1} parent=1 // pred_check
      _
    $region15: #{tpu_custom_call.1} parent=1 // pred_check_branch
      %42 = sbr.rel (0) target = $region17
    $region16: #{tpu_custom_call.1} parent=1 // pred_region
      %43 = dma.done [#allocation3], 128
    $region17: #{tpu_custom_call.1} parent=1 // pred_fallthru
      _
    // Predicated region
    $region18: #{tpu_custom_call.1} parent=1 // pred_check
      _
    $region19: #{tpu_custom_call.1} parent=1 // pred_check_branch
      %45 = sbr.rel (0) target = $region21
    $region20: #{tpu_custom_call.1} parent=1 // pred_region
      %46 = dma.done [#allocation6], 256
    $region21: #{tpu_custom_call.1} parent=1 // pred_fallthru
      _
    %p48 = scmp.eq.s32.totalorder 0, 0
    // Predicated region
    $region22: #{tpu_custom_call.1} parent=1 // pred_check
      %p49 = pneg %p48
    $region23: #{tpu_custom_call.1} parent=1 // pred_check_branch
      %51 = sbr.rel (%p49) target = $region25
    $region24: #{tpu_custom_call.1} parent=1 // pred_region
      %52 = vst [vmem:[#allocation8] sm:$0x1] 0.0
      %53 = vst [vmem:[#allocation10] sm:$0x1] 0.0
    $region25: #{tpu_custom_call.1} parent=1 // pred_fallthru
      _
    %v54 = vld [vmem:[%s2] sm:$0x1]
    %v55 = vld [vmem:[#allocation2] sm:$0xf]
    %v56 = vld [vmem:[#allocation2 + $0x4] sm:$0xf]
    %v57 = vld [vmem:[#allocation5] sm:$0xf]
    %v58 = vld [vmem:[#allocation5 + $0x4] sm:$0xf]
    %v59 = vld [vmem:[#allocation5 + $0x8] sm:$0xf]
    %v60 = vld [vmem:[#allocation5 + $0xc] sm:$0xf]
    %v62 = vlaneseq
    %v63 = vshrl.u32 %v62, 7
    %v64 = vsub.s32 0, %v63
    %v65 = vrot.slane %v54, %v64
    %v69 = vunpack.c.l.b16 %v55
    %v70 = vunpack.c.l.b16 %v56
    %v71 = vpack.c.b16 %v70, %v69
    %v76 = vunpack.c.l.b16 %v57
    %v77 = vunpack.c.l.b16 %v58
    %v78 = vunpack.c.l.b16 %v59
    %v79 = vunpack.c.l.b16 %v60
    %v80 = vpack.c.b16 %v77, %v76
    %v81 = vpack.c.b16 %v79, %v78
    %vm84 = vcmask 261120
    %v86 = vsel %vm84, %v71, 0
    %88 = vmatprep.subr.bf16.mxu0 0
    %89 = vmatpush1.bf16.msra.mxu0 %v80
    %90 = vmatprep.subr.bf16.mxu0 0
    %91 = vmatpush1.bf16.msra.mxu0 %v81
    %92 = vmatprep.subr.bf16.mxu0 0
    %93 = vmatpush1.bf16.msra.mxu0 0
    %94 = vmatprep.subr.bf16.mxu0 0
    %95 = vmatpush1.bf16.msra.mxu0 0
    %96 = vmatprep.subr.bf16.mxu0 0
    %97 = vmatpush1.bf16.msra.mxu0 0
    %98 = vmatprep.subr.bf16.mxu0 0
    %99 = vmatpush1.bf16.msra.mxu0 0
    %100 = vmatprep.subr.bf16.mxu0 0
    %101 = vmatpush1.bf16.msra.mxu0 0
    %102 = vmatprep.subr.bf16.mxu0 0
    %103 = vmatpush1.bf16.msra.mxu0 0
    %104 = vmatprep.subr.bf16.mxu0 0
    %105 = vmatpush1.bf16.msra.mxu0 0
    %106 = vmatprep.subr.bf16.mxu0 0
    %107 = vmatpush1.bf16.msra.mxu0 0
    %108 = vmatprep.subr.bf16.mxu0 0
    %109 = vmatpush1.bf16.msra.mxu0 0
    %110 = vmatprep.subr.bf16.mxu0 0
    %111 = vmatpush1.bf16.msra.mxu0 0
    %112 = vmatprep.subr.bf16.mxu0 0
    %113 = vmatpush1.bf16.msra.mxu0 0
    %114 = vmatprep.subr.bf16.mxu0 0
    %115 = vmatpush1.bf16.msra.mxu0 0
    %116 = vmatprep.subr.bf16.mxu0 0
    %117 = vmatpush1.bf16.msra.mxu0 0
    %118 = vmatprep.subr.bf16.mxu0 0
    %119 = vmatpush1.bf16.msra.mxu0 0
    %120 = vmatprep.mubr.bf16.mxu0 0
    %121 = vmatmul.mubr.bf16.gmra.mrb[0].mxu0 %v86
    %v122 = vpop.f32.mrb[0].mxu0
    %v123 = vadd.f32 %v65, %v122
    %v124 = vpop.f32.mrb[0].mxu0
    %v125 = vpop.f32.mrb[0].mxu0
    %v126 = vadd.f32 %v65, %v125
    %v127 = vpop.f32.mrb[0].mxu0
    %128 = vdwg.mxu0
    %129 = vst [vmem:[#allocation7] sm:$0xff] %v123
    %130 = vst [vmem:[#allocation7 + $0x8] sm:$0xff] %v126
    %s131 = smul.u32 0, 16
    %v132 = vlaneseq
    %v133 = vshrl.u32 %v132, 7
    %v134 = vadd.s32 %v133, 8
    %v135 = vstv %s131
    %v136 = vadd.s32 %v135, %v133
    %v137 = vadd.s32 %v135, %v134
    %vm138 = vcmp.lt.s32.totalorder %v136, 16
    %vm139 = vcmp.lt.s32.totalorder %v137, 16
    %v140 = vsub.f32 %v123, %v65
    %v141 = vsub.f32 %v126, %v65
    %v142 = vsel %vm138, %v140, 0.0
    %v143 = vsel %vm139, %v141, 0.0
    %v144 = vld [vmem:[#allocation8] sm:$0x1]
    %v145 = vadd.f32 %v142, %v143
    %v146 = vrot.slane %v145, 4
    %v147 = vadd.f32 %v145, %v146
    %v148 = vrot.slane %v147, 2
    %v149 = vadd.f32 %v147, %v148
    %v150 = vrot.slane %v149, 1
    %v151 = vadd.f32 %v149, %v150
    %v152 = vadd.f32 %v144, %v151
    %153 = vst [vmem:[#allocation8] sm:$0x1] %v152
    %v154 = vld [vmem:[#allocation10] sm:$0x1]
    %v155 = vmul.f32 %v142, %v142
    %v156 = vmul.f32 %v143, %v143
    %v157 = vadd.f32 %v155, %v156
    %v158 = vrot.slane %v157, 4
    %v159 = vadd.f32 %v157, %v158
    %v160 = vrot.slane %v159, 2
    %v161 = vadd.f32 %v159, %v160
    %v162 = vrot.slane %v161, 1
    %v163 = vadd.f32 %v161, %v162
    %v164 = vadd.f32 %v154, %v163
    %165 = vst [vmem:[#allocation10] sm:$0x1] %v164
    // Predicated region
    $region26: #{tpu_custom_call.1} parent=1 // pred_check
      %p166 = pneg %p48
    $region27: #{tpu_custom_call.1} parent=1 // pred_check_branch
      %168 = sbr.rel (%p166) target = $region29
    $region28: #{tpu_custom_call.1} parent=1 // pred_region
      %v169 = vld [vmem:[#allocation8] sm:$0x1]
      %v170 = vmul.f32 %v169, 0.0625
      %v171 = vadd.f32 %v54, %v170
      %172 = vst [vmem:[#allocation8] sm:$0x1] %v171
      %v173 = vld [vmem:[#allocation10] sm:$0x1]
      %v174 = vmul.f32 %v173, 0.0625
      %v175 = vmul.f32 %v170, %v170
      %v176 = vsub.f32 %v174, %v175
      %177 = vst [vmem:[#allocation10] sm:$0x1] %v176
    $region29: #{tpu_custom_call.1} parent=1 // pred_fallthru
      _
    // Predicated region
    $region30: #{tpu_custom_call.1} parent=1 // pred_check
      _
    $region31: #{tpu_custom_call.1} parent=1 // pred_check_branch
      %179 = sbr.rel (0) target = $region33
    $region32: #{tpu_custom_call.1} parent=1 // pred_region
      %s181 = ssub.s32 256, 256
      %182 = vsyncadd [#allocation4], %s181
      %s183 = sshll.u32 [#allocation7], 4
      %s184 = int_to_ptr.vmem [resolvable:$true] %s183
      %189 = dma.vmem_to_hbm [thread:$0]  %s184, 256, %s3, [#allocation4], 128, 128, 8
    $region33: #{tpu_custom_call.1} parent=1 // pred_fallthru
      _
    // Predicated region
    $region34: #{tpu_custom_call.1} parent=1 // pred_check
      _
    $region35: #{tpu_custom_call.1} parent=1 // pred_check_branch
      %191 = sbr.rel (0) target = $region37
    $region36: #{tpu_custom_call.1} parent=1 // pred_region
      %s193 = ssub.s32 16, 16
      %194 = vsyncadd [#allocation9], %s193
      %s196 = sshll.u32 [#allocation8], 4
      %s197 = int_to_ptr.vmem [resolvable:$true] %s196
      %199 = dma.vmem_to_hbm [thread:$0]  %s197, 16, %s4, [#allocation9]
    $region37: #{tpu_custom_call.1} parent=1 // pred_fallthru
      _
    // Predicated region
    $region38: #{tpu_custom_call.1} parent=1 // pred_check
      _
    $region39: #{tpu_custom_call.1} parent=1 // pred_check_branch
      %201 = sbr.rel (0) target = $region41
    $region40: #{tpu_custom_call.1} parent=1 // pred_region
      %s203 = ssub.s32 16, 16
      %204 = vsyncadd [#allocation9], %s203
      %s206 = sshll.u32 [#allocation10], 4
      %s207 = int_to_ptr.vmem [resolvable:$true] %s206
      %209 = dma.vmem_to_hbm [thread:$0]  %s207, 16, %s5, [#allocation9]
    $region41: #{tpu_custom_call.1} parent=1 // pred_fallthru
      _
    // Predicated region
    $region42: #{tpu_custom_call.1} parent=1 // pred_check
      _
    $region43: #{tpu_custom_call.1} parent=1 // pred_check_branch
      %211 = sbr.rel (0) target = $region45
    $region44: #{tpu_custom_call.1} parent=1 // pred_region
      %212 = dma.done [#allocation4], 256
    $region45: #{tpu_custom_call.1} parent=1 // pred_fallthru
      _
    // Predicated region
    $region46: #{tpu_custom_call.1} parent=1 // pred_check
      _
    $region47: #{tpu_custom_call.1} parent=1 // pred_check_branch
      %214 = sbr.rel (0) target = $region49
    $region48: #{tpu_custom_call.1} parent=1 // pred_region
      %215 = dma.done [#allocation9], 16
    $region49: #{tpu_custom_call.1} parent=1 // pred_fallthru
      _
    // Predicated region
    $region50: #{tpu_custom_call.1} parent=1 // pred_check
      _
    $region51: #{tpu_custom_call.1} parent=1 // pred_check_branch
      %217 = sbr.rel (0) target = $region53
    $region52: #{tpu_custom_call.1} parent=1 // pred_region
      %218 = dma.done [#allocation9], 16
    $region53: #{tpu_custom_call.1} parent=1 // pred_fallthru
      _
    %219 = vsyncpa [#allocation3], 1
    %220 = vsyncpa [#allocation6], 1
    %221 = vsyncpa [#allocation4], 1
    %222 = vsyncpa [#allocation9], 1

</llo_original>
